<compile_context>
chip_gen: v7x
topology: tpu7x:2x2x1
jax: 0.10.0
libtpu: 0.0.40
codegen_flags: <defaults>
</compile_context>

<pallas_src>
import jax
import jax.numpy as jnp
from jax.experimental import pallas as pl
from jax.experimental.pallas import tpu as pltpu


def _round_up(x, m):
    return ((x + m - 1) // m) * m


def _round_down(x, m):
    return (x // m) * m


def _vmem_capacity_bytes():
    """Physical VMEM per TensorCore; falls back to the smallest known size."""
    try:
        info = pltpu.get_tpu_info()
        for attr in ("vmem_capacity_bytes", "vmem_bytes", "vmem_size_bytes"):
            v = getattr(info, attr, None)
            if v:
                return int(v)
    except Exception:
        pass
    return 64 * 1024 * 1024  # v7x per-TC size: safe lower bound everywhere


def _make_generator_kernel(tv):
    def kernel(x_ref, w_ref, b_ref, o_ref, m_ref, l_ref):
        # x_ref: (tm, D) compute dtype   w_ref: (D, tv)   b_ref: (1, tv) f32
        # o_ref: (tm, V_pad) resident output slab (flushed once per row tile)
        # m_ref / l_ref: (tm, 1) f32 running max / running sum(exp)
        j = pl.program_id(1)
        nj = pl.num_programs(1)

        @pl.when(j == 0)
        def _():
            m_ref[...] = jnp.full_like(m_ref, -jnp.inf)
            l_ref[...] = jnp.zeros_like(l_ref)

        # Projection tile: MXU matmul with f32 accumulation, bias folded in f32.
        logits = (
            jnp.dot(x_ref[...], w_ref[...], preferred_element_type=jnp.float32)
            + b_ref[...]
        )

        # Online logsumexp update (exp/log -> EUP, row reductions -> XLU; both
        # overlap the next weight tile's DMA / matmul).
        m_prev = m_ref[...]
        m_new = jnp.maximum(m_prev, jnp.max(logits, axis=-1, keepdims=True))
        l_ref[...] = l_ref[...] * jnp.exp(m_prev - m_new) + jnp.sum(
            jnp.exp(logits - m_new), axis=-1, keepdims=True
        )
        m_ref[...] = m_new

        # Stash the (still unnormalized) logits into the resident output slab.
        col = pl.multiple_of(j * tv, 128)
        o_ref[:, pl.ds(col, tv)] = logits.astype(o_ref.dtype)

        @pl.when(j == nj - 1)
        def _():
            # Normalize the whole resident row block in place; it is written
            # back to HBM exactly once, after this final vocab step.
            lse = m_ref[...] + jnp.log(l_ref[...])
            o_ref[...] = (o_ref[...].astype(jnp.float32) - lse).astype(o_ref.dtype)

    return kernel


def generator_forward(x, weight_t, bias, *, tm=None, tv=None, out_dtype=None,
                      compute_dtype=jnp.bfloat16):
    """Fused Linear(d_model->vocab) + log_softmax.

    x:        [B, S, D]
    weight_t: [D, V]   (transposed nn.Linear weight)
    bias:     [V]
    Returns   [B, S, V] log-probabilities in `out_dtype` (default: x.dtype).
    """
    B, S, D = x.shape
    D2, V = weight_t.shape
    assert D == D2, "weight_t must be [d_model, vocab]"
    M = B * S
    out_dtype = out_dtype or x.dtype
    if compute_dtype is None:
        compute_dtype = x.dtype

    vmem_cap = _vmem_capacity_bytes()
    vmem_limit = min((vmem_cap * 3) // 4, 110 * 1024 * 1024)

    # ---- vocab tiling: prefer a tv that divides V_pad (and ideally V itself,
    # so no padding -> no post-kernel copy of the [M, V] output).
    V_pad = _round_up(V, 128)
    if tv is None:
        tv = 128
        for cand in (1024, 512, 256, 128):
            if V_pad % cand == 0:
                tv = cand
                break
    assert tv % 128 == 0 and V_pad % tv == 0

    # ---- row tiling: big tiles to amortize the weight stream, capped so the
    # double-buffered resident output slab + streamed weight tiles fit VMEM.
    M8 = _round_up(M, 8)
    comp_isz = jnp.dtype(compute_dtype).itemsize
    out_isz = jnp.dtype(out_dtype).itemsize
    if tm is None:
        target_tm = 1024 if vmem_cap >= 96 * 1024 * 1024 else 512
        budget = vmem_limit - 4 * 1024 * 1024          # headroom
        fixed = 3 * D * tv * comp_isz + 3 * tv * 4     # weight + bias buffers
        per_row = 2 * V_pad * out_isz + 2 * D * comp_isz + 2 * tv * 4
        tm_fit = max(8, _round_down(max(budget - fixed, per_row * 8) // per_row, 8))
        tm = min(target_tm, tm_fit)
    tm = max(8, min(_round_up(tm, 8), M8))
    # Keep >= 2 row tiles so the "parallel" axis can split across the two
    # TensorCores on v7x (no-op on v5e/v6e).
    if M8 >= 16 and M8 // tm < 2:
        tm = _round_up((M8 + 1) // 2, 8)
    M_pad = _round_up(M, tm)

    # ---- operand prep (casts hoisted out of the kernel, done once).
    x2d = x.reshape(M, D).astype(compute_dtype)
    if M_pad != M:
        x2d = jnp.pad(x2d, ((0, M_pad - M), (0, 0)))

    w = weight_t.astype(compute_dtype)
    b = bias.astype(jnp.float32)
    if V_pad != V:
        w = jnp.pad(w, ((0, 0), (0, V_pad - V)))
        # Padded vocab columns get a huge negative (but finite) bias so they
        # never contribute to the logsumexp and produce no inf-inf NaNs.
        b = jnp.pad(b, (0, V_pad - V), constant_values=-1e30)
    b2d = b.reshape(1, V_pad)

    grid = (M_pad // tm, V_pad // tv)  # (row tiles "parallel", vocab sweep)
    kernel = _make_generator_kernel(tv)

    def run(weight_buffers):
        w_idx = lambda i, j: (0, j)
        if weight_buffers > 2:
            # Triple-buffer the critical weight DMA stream to hide HBM latency
            # jitter at row-tile boundaries.
            w_spec = pl.BlockSpec((D, tv), w_idx,
                                  pipeline_mode=pl.Buffered(weight_buffers))
        else:
            w_spec = pl.BlockSpec((D, tv), w_idx)
        return pl.pallas_call(
            kernel,
            out_shape=jax.ShapeDtypeStruct((M_pad, V_pad), out_dtype),
            grid_spec=pltpu.PrefetchScalarGridSpec(
                num_scalar_prefetch=0,
                grid=grid,
                in_specs=[
                    # Row tile of activations: resident across the vocab sweep.
                    pl.BlockSpec((tm, D), lambda i, j: (i, 0)),
                    # Streamed weight tile over the vocab axis.
                    w_spec,
                    # Matching bias tile (f32).
                    pl.BlockSpec((1, tv), lambda i, j: (0, j)),
                ],
                # Full vocab row resident across the j sweep; written back to
                # HBM exactly once per row tile, after the final vocab step.
                out_specs=pl.BlockSpec((tm, V_pad), lambda i, j: (i, 0)),
                scratch_shapes=[
                    pltpu.VMEM((tm, 1), jnp.float32),  # running max
                    pltpu.VMEM((tm, 1), jnp.float32),  # running sum(exp)
                ],
            ),
            compiler_params=pltpu.CompilerParams(
                dimension_semantics=("parallel", "arbitrary"),
                vmem_limit_bytes=int(vmem_limit),
            ),
        )(x2d, w, b2d)

    try:
        out2d = run(3)
    except Exception:
        # Fallback if this JAX build rejects pipeline_mode=pl.Buffered(3).
        out2d = run(2)

    if M_pad != M or V_pad != V:
        out2d = out2d[:M, :V]
    return out2d.reshape(B, S, V)


def reference_forward(x, weight_t, bias):
    logits = jnp.einsum("bsd,dv->bsv", x, weight_t) + bias
    return jax.nn.log_softmax(logits, axis=-1)


if __name__ == "__main__":
    def check(B, S, D, V, seed=0):
        key = jax.random.PRNGKey(seed)
        kx, kw, kb = jax.random.split(key, 3)
        x = jax.random.normal(kx, (B, S, D), dtype=jnp.float32)
        bound = 1.0 / (D ** 0.5)
        weight_t = jax.random.uniform(kw, (D, V), minval=-bound, maxval=bound,
                                      dtype=jnp.float32)
        bias = jax.random.uniform(kb, (V,), minval=-bound, maxval=bound,
                                  dtype=jnp.float32)

        out = generator_forward(x, weight_t, bias)
        jax.block_until_ready(out)
        assert out.shape == (B, S, V)

        # Reference on bf16-rounded operands (the kernel feeds bf16 to the MXU
        # and does all post-matmul math in f32).
        x_r = x.astype(jnp.bfloat16).astype(jnp.float32)
        w_r = weight_t.astype(jnp.bfloat16).astype(jnp.float32)
        ref = reference_forward(x_r, w_r, bias)
        err = float(jnp.max(jnp.abs(out.astype(jnp.float32) - ref)))
        assert jnp.allclose(out.astype(jnp.float32), ref, atol=2e-3, rtol=2e-3), (
            f"mismatch vs reference for {(B, S, D, V)}: max abs err {err}")

    # Primary small config (no padding, single vocab tile).
    check(2, 8, 32, 128)
    # Multiple vocab tiles: exercises the online logsumexp + resident slab.
    check(2, 8, 32, 384)
    # Ragged rows + vocab padding: exercises pad masking + final slice path.
    check(2, 9, 32, 200)

    print("KERNEL_OK")
</pallas_src>

<mosaic_0001>
module attributes {stable_mosaic.version = 11 : i64} {
  func.func @kernel(%arg0: i32, %arg1: i32, %arg2: memref<8x32xbf16, #tpu.memory_space<vmem>>, %arg3: memref<32x128xbf16, #tpu.memory_space<vmem>>, %arg4: memref<1x128xf32, #tpu.memory_space<vmem>>, %arg5: memref<8x128xf32, #tpu.memory_space<vmem>>, %arg6: memref<8x1xf32, #tpu.memory_space<vmem>>, %arg7: memref<8x1xf32, #tpu.memory_space<vmem>>) attributes {dimension_semantics = [#tpu.dimension_semantics<parallel>, #tpu.dimension_semantics<arbitrary>], iteration_bounds = array<i64: 2, 1>, scalar_prefetch = 0 : i64, scratch_operands = 2 : i64, tpu.core_type = #tpu.core_type<tc>, window_params = [{transform_indices = @transform_0, window_bounds = array<i64: 8, 32>}, {transform_indices = @transform_1, window_bounds = array<i64: 32, 128>}, {transform_indices = @transform_2, window_bounds = array<i64: 1, 128>}, {transform_indices = @transform_3, window_bounds = array<i64: 8, 128>}]} {
    %c0_i32 = arith.constant 0 : i32
    %0 = arith.cmpi eq, %arg1, %c0_i32 : i32
    %1 = arith.extui %0 : i1 to i32
    %c0_i32_0 = arith.constant 0 : i32
    %2 = arith.cmpi ne, %1, %c0_i32_0 : i32
    scf.if %2 {
      %cst_19 = arith.constant 0xFF800000 : f32
      %32 = vector.broadcast %cst_19 : f32 to vector<8x1xf32>
      %c0_20 = arith.constant 0 : index
      %c0_21 = arith.constant 0 : index
      %33 = vector.load %arg6[%c0_20, %c0_21] : memref<8x1xf32, #tpu.memory_space<vmem>>, vector<8x1xf32>
      tpu.vector_store %arg6[%c0_20, %c0_21], %32 {strides = array<i32>} : memref<8x1xf32, #tpu.memory_space<vmem>>, vector<8x1xf32>,
      %cst_22 = arith.constant 0.000000e+00 : f32
      %34 = vector.broadcast %cst_22 : f32 to vector<8x1xf32>
      %c0_23 = arith.constant 0 : index
      %c0_24 = arith.constant 0 : index
      %35 = vector.load %arg7[%c0_23, %c0_24] : memref<8x1xf32, #tpu.memory_space<vmem>>, vector<8x1xf32>
      tpu.vector_store %arg7[%c0_23, %c0_24], %34 {strides = array<i32>} : memref<8x1xf32, #tpu.memory_space<vmem>>, vector<8x1xf32>,
    } else {
    }
    %c0 = arith.constant 0 : index
    %c0_1 = arith.constant 0 : index
    %3 = vector.load %arg2[%c0, %c0_1] : memref<8x32xbf16, #tpu.memory_space<vmem>>, vector<8x32xbf16>
    %c0_2 = arith.constant 0 : index
    %c0_3 = arith.constant 0 : index
    %4 = vector.load %arg3[%c0_2, %c0_3] : memref<32x128xbf16, #tpu.memory_space<vmem>>, vector<32x128xbf16>
    %cst = arith.constant dense<0.000000e+00> : vector<8x128xf32>
    %5 = tpu.matmul %3, %4, %cst {dimension_numbers = #tpu.dot_dimension_numbers<[1], [0], [0], [1], [0, 0, 1, 1], [], []>} : vector<8x32xbf16>, vector<32x128xbf16>, vector<8x128xf32> -> vector<8x128xf32>
    %c0_4 = arith.constant 0 : index
    %c0_5 = arith.constant 0 : index
    %6 = vector.load %arg4[%c0_4, %c0_5] : memref<1x128xf32, #tpu.memory_space<vmem>>, vector<1x128xf32>
    %7 = vector.broadcast %6 : vector<1x128xf32> to vector<8x128xf32>
    %8 = arith.addf %5, %7 : vector<8x128xf32>
    %c0_6 = arith.constant 0 : index
    %c0_7 = arith.constant 0 : index
    %9 = vector.load %arg6[%c0_6, %c0_7] : memref<8x1xf32, #tpu.memory_space<vmem>>, vector<8x1xf32>
    %cst_8 = arith.constant dense<0xFF800000> : vector<8xf32>
    %10 = vector.multi_reduction <maximumf>, %8, %cst_8 [1] : vector<8x128xf32> to vector<8xf32>
    %11 = vector.shape_cast %10 : vector<8xf32> to vector<8x1xf32>
    %12 = arith.maximumf %9, %11 : vector<8x1xf32>
    %c0_9 = arith.constant 0 : index
    %c0_10 = arith.constant 0 : index
    %13 = vector.load %arg7[%c0_9, %c0_10] : memref<8x1xf32, #tpu.memory_space<vmem>>, vector<8x1xf32>
    %14 = arith.subf %9, %12 : vector<8x1xf32>
    %15 = math.exp %14 : vector<8x1xf32>
    %16 = arith.mulf %13, %15 : vector<8x1xf32>
    %17 = vector.broadcast %12 : vector<8x1xf32> to vector<8x128xf32>
    %18 = arith.subf %8, %17 : vector<8x128xf32>
    %19 = math.exp %18 : vector<8x128xf32>
    %cst_11 = arith.constant dense<0.000000e+00> : vector<8xf32>
    %20 = vector.multi_reduction <add>, %19, %cst_11 [1] : vector<8x128xf32> to vector<8xf32>
    %21 = vector.shape_cast %20 : vector<8xf32> to vector<8x1xf32>
    %22 = arith.addf %16, %21 : vector<8x1xf32>
    %c0_12 = arith.constant 0 : index
    %c0_13 = arith.constant 0 : index
    %23 = vector.load %arg7[%c0_12, %c0_13] : memref<8x1xf32, #tpu.memory_space<vmem>>, vector<8x1xf32>
    tpu.vector_store %arg7[%c0_12, %c0_13], %22 {strides = array<i32>} : memref<8x1xf32, #tpu.memory_space<vmem>>, vector<8x1xf32>,
    %c0_14 = arith.constant 0 : index
    %c0_15 = arith.constant 0 : index
    %24 = vector.load %arg6[%c0_14, %c0_15] : memref<8x1xf32, #tpu.memory_space<vmem>>, vector<8x1xf32>
    tpu.vector_store %arg6[%c0_14, %c0_15], %12 {strides = array<i32>} : memref<8x1xf32, #tpu.memory_space<vmem>>, vector<8x1xf32>,
    %c128_i32 = arith.constant 128 : i32
    %25 = arith.muli %arg1, %c128_i32 : i32
    %26 = tpu.assume_multiple %25, 128 : i32
    %c0_16 = arith.constant 0 : index
    %27 = arith.index_cast %26 : i32 to index
    %28 = vector.load %arg5[%c0_16, %27] : memref<8x128xf32, #tpu.memory_space<vmem>>, vector<8x128xf32>
    tpu.vector_store %arg5[%c0_16, %27], %8 {strides = array<i32>} : memref<8x128xf32, #tpu.memory_space<vmem>>, vector<8x128xf32>,
    %c0_i32_17 = arith.constant 0 : i32
    %29 = arith.cmpi eq, %arg1, %c0_i32_17 : i32
    %30 = arith.extui %29 : i1 to i32
    %c0_i32_18 = arith.constant 0 : i32
    %31 = arith.cmpi ne, %30, %c0_i32_18 : i32
    scf.if %31 {
      %c0_19 = arith.constant 0 : index
      %c0_20 = arith.constant 0 : index
      %32 = vector.load %arg6[%c0_19, %c0_20] : memref<8x1xf32, #tpu.memory_space<vmem>>, vector<8x1xf32>
      %c0_21 = arith.constant 0 : index
      %c0_22 = arith.constant 0 : index
      %33 = vector.load %arg7[%c0_21, %c0_22] : memref<8x1xf32, #tpu.memory_space<vmem>>, vector<8x1xf32>
      %34 = math.log %33 : vector<8x1xf32>
      %35 = arith.addf %32, %34 : vector<8x1xf32>
      %c0_23 = arith.constant 0 : index
      %c0_24 = arith.constant 0 : index
      %36 = vector.load %arg5[%c0_23, %c0_24] : memref<8x128xf32, #tpu.memory_space<vmem>>, vector<8x128xf32>
      %37 = vector.broadcast %35 : vector<8x1xf32> to vector<8x128xf32>
      %38 = arith.subf %36, %37 : vector<8x128xf32>
      %c0_25 = arith.constant 0 : index
      %c0_26 = arith.constant 0 : index
      %39 = vector.load %arg5[%c0_25, %c0_26] : memref<8x128xf32, #tpu.memory_space<vmem>>, vector<8x128xf32>
      tpu.vector_store %arg5[%c0_25, %c0_26], %38 {strides = array<i32>} : memref<8x128xf32, #tpu.memory_space<vmem>>, vector<8x128xf32>,
    } else {
    }
    return
  }
  func.func @transform_0(%arg0: i32, %arg1: i32) -> (i32, i32) {
    %c0_i32 = arith.constant 0 : i32
    %c0_i32_0 = arith.constant 0 : i32
    return %arg0, %c0_i32 : i32, i32
  }
  func.func @transform_1(%arg0: i32, %arg1: i32) -> (i32, i32) {
    %c0_i32 = arith.constant 0 : i32
    %c0_i32_0 = arith.constant 0 : i32
    return %c0_i32, %arg1 : i32, i32
  }
  func.func @transform_2(%arg0: i32, %arg1: i32) -> (i32, i32) {
    %c0_i32 = arith.constant 0 : i32
    %c0_i32_0 = arith.constant 0 : i32
    return %c0_i32, %arg1 : i32, i32
  }
  func.func @transform_3(%arg0: i32, %arg1: i32) -> (i32, i32) {
    %c0_i32 = arith.constant 0 : i32
    %c0_i32_0 = arith.constant 0 : i32
    return %arg0, %c0_i32 : i32, i32
  }
}

</mosaic_0001>

<llo_original>
// kernel: tpu_custom_call.1
$region0: #{tpu_custom_call.1}
  #allocation0 [shape = 'u32[]', space=smem, size = 0x4, offset = 0x4, fixed_abs, tag = 'smem constant byte address 0x4 - core index']
  #allocation1 [shape = 'u32[144,128]{1,0:T(1,128)}', space=vmem, size = 0x12000, scoped, tag = 'internal scratch']
  #allocation2 [shape = 'f32[8,1]{1,0:T(8,128)}', space=vmem, size = 0x1000, scoped, tag = 'scratch operand']
  #allocation3 [shape = 'f32[8,1]{1,0:T(8,128)}', space=vmem, size = 0x1000, scoped, tag = 'scratch operand']
  %s0 = inlined_call_operand.hbm [shape: bf16[16,32], index: 0, kind: input, shape index: {}]
  %s1 = inlined_call_operand.hbm [shape: bf16[32,128], index: 1, kind: input, shape index: {}]
  %s2 = inlined_call_operand.vmem [shape: f32[1,128], index: 2, kind: input, shape index: {}]
  %s3 = inlined_call_operand.hbm [shape: f32[16,128], index: 3, kind: output, shape index: {}]
  %s4 = sld [smem:[#allocation0]]
  $region61: #{tpu_custom_call.1} parent=0
    _
  %s6 = ssub.s32 1, %s4
  %s7 = scalar_select 0, %s6, %s4
  $region1: #{tpu_custom_call.1} parent=0
    #allocation4 [shape = 'u8[4096]{0}', space=vmem, size = 0x1000, scoped, tag = 'input window, operand 0']
    #allocation5 [shape = 's32[2]{0}', space=sflag, size = 0x8, scoped, tag = 'scoped memory for tpu_custom_call.1']
    #allocation6 [shape = 's32[2]{0}', space=sflag, size = 0x8, scoped, tag = 'scoped memory for tpu_custom_call.1']
    #allocation7 [shape = 'u8[8192]{0}', space=vmem, size = 0x2000, scoped, tag = 'input window, operand 1, single buffered']
    #allocation8 [shape = 's32[1]{0}', space=sflag, size = 0x4, scoped, tag = 'scoped memory for tpu_custom_call.1']
    #allocation9 [shape = 'u8[8192]{0}', space=vmem, size = 0x2000, scoped, tag = 'output window, operand 0']
    %8 = vsyncpa [#allocation5], 0
    %s9 = scalar_lea.sflag [#allocation5], 1
    %10 = vsyncpa %s9, 0
    %11 = vsyncpa [#allocation8], 0
    %12 = vsyncpa [#allocation6], 0
    %s13 = scalar_lea.sflag [#allocation6], 1
    %14 = vsyncpa %s13, 0
    loop: start=0, step=1, limit=4
    $region2: #{tpu_custom_call.1} parent=1 // loop_pre_header
      _
    $region3: #{tpu_custom_call.1} parent=1 // loop_header
      %s16 = sphi 0, %s20
      %p17 = scmp.ge.s32.totalorder %s16, 4
      %s23 = sphi 0, %s35
      %s24 = sphi 0, %s31
      %s25 = sphi 0, %s23
      %s26 = sphi 0, %s24
      %s27 = sphi 0, %s25
      %s28 = sphi 0, %s26
      %s38 = sphi 0, %s40
      %s41 = sphi 0, %s38
      %s42 = sphi 0, %s41
      %s58 = sphi 0, %s42
      %s64 = sphi 0, %s66
      %s67 = sphi 0, %s64
      %s68 = sphi 0, %s67
      %s84 = sphi 0, %s68
      %s90 = sphi 0, %s92
      %s93 = sphi 0, %s90
      %s94 = sphi 0, %s93
      %s110 = sphi 0, %s94
      %s116 = sphi 0, %s118
      %s119 = sphi 0, %s116
      %s120 = sphi 0, %s119
      %s136 = sphi 0, %s120
    $region4: #{tpu_custom_call.1} parent=1 // loop_header_branch
      %19 = sbr.rel (%p17) target = $region8
    $region5: #{tpu_custom_call.1} parent=1 // loop_body
      %s21 = ssub.s32 %s16, 1
      %s22 = ssub.s32 %s16, 2
      %s29 = sadd.s32 1, %s24
      %p30 = scmp.ge.s32.totalorder %s29, 1
      %s31 = scalar_select %p30, 0, %s29
      %s32 = sadd.s32 1, %s23
      %s33 = scalar_select %p30, %s32, %s23
      %p34 = scmp.ge.s32.totalorder %s33, 2
      %s35 = scalar_select %p34, 0, %s33
      %s36 = ssub.s32 %s23, %s35
      %p37 = scmp.eq.s32.totalorder %s36, 0
      %s39 = sadd.s32 %s38, 1
      %s40 = scalar_select %p37, %s38, %s39
      %p43 = pneg %p37
      %p44 = scmp.eq.s32.totalorder %s16, 1
      %p45 = por %p43, %p44
      %p46 = scmp.ne.s32.totalorder %s38, %s41
      %p47 = scmp.eq.s32.totalorder %s16, 0
      %p48 = por %p46, %p47
      %p49 = scmp.ne.s32.totalorder %s38, %s41
      %p50 = scmp.eq.s32.totalorder %s21, 1
      %p51 = por %p49, %p50
      %p52 = scmp.ne.s32.totalorder %s41, %s42
      %p53 = scmp.eq.s32.totalorder %s21, 0
      %p54 = por %p52, %p53
      %p55 = scmp.ne.s32.totalorder %s41, %s42
      %p56 = scmp.eq.s32.totalorder %s22, 1
      %p57 = por %p55, %p56
      %p59 = scmp.ne.s32.totalorder %s42, %s58
      %p60 = scmp.eq.s32.totalorder %s22, 0
      %p61 = por %p59, %p60
      %s62 = ssub.s32 %s24, %s31
      %p63 = scmp.eq.s32.totalorder %s62, 0
      %s65 = sadd.s32 %s64, 1
      %s66 = scalar_select %p63, %s64, %s65
      %p69 = pneg %p63
      %p70 = scmp.eq.s32.totalorder %s16, 1
      %p71 = por %p69, %p70
      %p72 = scmp.ne.s32.totalorder %s64, %s67
      %p73 = scmp.eq.s32.totalorder %s16, 0
      %p74 = por %p72, %p73
      %p75 = scmp.ne.s32.totalorder %s64, %s67
      %p76 = scmp.eq.s32.totalorder %s21, 1
      %p77 = por %p75, %p76
      %p78 = scmp.ne.s32.totalorder %s67, %s68
      %p79 = scmp.eq.s32.totalorder %s21, 0
      %p80 = por %p78, %p79
      %p81 = scmp.ne.s32.totalorder %s67, %s68
      %p82 = scmp.eq.s32.totalorder %s22, 1
      %p83 = por %p81, %p82
      %p85 = scmp.ne.s32.totalorder %s68, %s84
      %p86 = scmp.eq.s32.totalorder %s22, 0
      %p87 = por %p85, %p86
      %s88 = ssub.s32 %s24, %s31
      %p89 = scmp.eq.s32.totalorder %s88, 0
      %s91 = sadd.s32 %s90, 1
      %s92 = scalar_select %p89, %s90, %s91
      %p95 = pneg %p89
      %p96 = scmp.eq.s32.totalorder %s16, 1
      %p97 = por %p95, %p96
      %p98 = scmp.ne.s32.totalorder %s90, %s93
      %p99 = scmp.eq.s32.totalorder %s16, 0
      %p100 = por %p98, %p99
      %p101 = scmp.ne.s32.totalorder %s90, %s93
      %p102 = scmp.eq.s32.totalorder %s21, 1
      %p103 = por %p101, %p102
      %p104 = scmp.ne.s32.totalorder %s93, %s94
      %p105 = scmp.eq.s32.totalorder %s21, 0
      %p106 = por %p104, %p105
      %p107 = scmp.ne.s32.totalorder %s93, %s94
      %p108 = scmp.eq.s32.totalorder %s22, 1
      %p109 = por %p107, %p108
      %p111 = scmp.ne.s32.totalorder %s94, %s110
      %p112 = scmp.eq.s32.totalorder %s22, 0
      %p113 = por %p111, %p112
      %s114 = ssub.s32 %s23, %s35
      %p115 = scmp.eq.s32.totalorder %s114, 0
      %s117 = sadd.s32 %s116, 1
      %s118 = scalar_select %p115, %s116, %s117
      %p121 = pneg %p115
      %p122 = scmp.eq.s32.totalorder %s16, 1
      %p123 = por %p121, %p122
      %p124 = scmp.ne.s32.totalorder %s116, %s119
      %p125 = scmp.eq.s32.totalorder %s16, 0
      %p126 = por %p124, %p125
      %p127 = scmp.ne.s32.totalorder %s116, %s119
      %p128 = scmp.eq.s32.totalorder %s21, 1
      %p129 = por %p127, %p128
      %p130 = scmp.ne.s32.totalorder %s119, %s120
      %p131 = scmp.eq.s32.totalorder %s21, 0
      %p132 = por %p130, %p131
      %p133 = scmp.ne.s32.totalorder %s119, %s120
      %p134 = scmp.eq.s32.totalorder %s22, 1
      %p135 = por %p133, %p134
      %p137 = scmp.ne.s32.totalorder %s120, %s136
      %p138 = scmp.eq.s32.totalorder %s22, 0
      %p139 = por %p137, %p138
      %p140 = scmp.le.s32.totalorder 1, %s16
      %p141 = scmp.lt.s32.totalorder %s16, 3
      %p142 = pnand %p140, %p141
      %p143 = pneg %p142
      // Predicated region
      $region9: #{tpu_custom_call.1} parent=5 // pred_check
        _
      $region10: #{tpu_custom_call.1} parent=5 // pred_check_branch
        %145 = sbr.rel (%p142) target = $region12
      $region11: #{tpu_custom_call.1} parent=5 // pred_region
        %s146 = ssub.s32 %s16, 1
        // Predicated region
        $region13: #{tpu_custom_call.1} parent=11 // pred_check
          %p147 = pneg %p80
        $region14: #{tpu_custom_call.1} parent=11 // pred_check_branch
          %149 = sbr.rel (%p147) target = $region16
        $region15: #{tpu_custom_call.1} parent=11 // pred_region
          %s151 = ssub.s32 256, 256
          %152 = vsyncadd [#allocation8], %s151
          %s153 = smul.addr %s26, 64
          %s154 = scalar_lea.hbm %s1, %s153
          %s155 = sshll.u32 [#allocation7], 4
          %s156 = int_to_ptr.vmem [resolvable:$true] %s155
          %161 = dma.hbm_to_vmem [thread:$0]  %s154, 256, %s156, [#allocation8], 64, 64, 4
        $region16: #{tpu_custom_call.1} parent=11 // pred_fallthru
          _
        // Predicated region
        $region17: #{tpu_custom_call.1} parent=11 // pred_check
          %p162 = pneg %p106
        $region18: #{tpu_custom_call.1} parent=11 // pred_check_branch
          %164 = sbr.rel (%p162) target = $region20
        $region19: #{tpu_custom_call.1} parent=11 // pred_region
          %p165 = scmp.lt.s32.totalorder %s26, 0
          %s166 = scalar_select %p165, %s26, 0
          %s167 = scalar_lea.vmem %s2, %s166
        $region20: #{tpu_custom_call.1} parent=11 // pred_fallthru
          _
      $region12: #{tpu_custom_call.1} parent=5 // pred_fallthru
        _
      %p168 = scmp.lt.s32.totalorder %s16, 2
      // Predicated region
      $region21: #{tpu_custom_call.1} parent=5 // pred_check
        %p169 = pneg %p168
      $region22: #{tpu_custom_call.1} parent=5 // pred_check_branch
        %171 = sbr.rel (%p169) target = $region24
      $region23: #{tpu_custom_call.1} parent=5 // pred_region
        // Predicated region
        $region25: #{tpu_custom_call.1} parent=23 // pred_check
          %p172 = pneg %p48
        $region26: #{tpu_custom_call.1} parent=23 // pred_check_branch
          %174 = sbr.rel (%p172) target = $region28
        $region27: #{tpu_custom_call.1} parent=23 // pred_region
          %s175 = sand.u32 %s38, 1
          %s176 = scalar_lea.sflag [#allocation5], %s175
          %s177 = sand.u32 %s38, 1
          %s178 = smul.addr %s177, 4
          %s179 = scalar_lea.vmem [#allocation4], %s178
          %s181 = ssub.s32 64, 64
          %182 = vsyncadd %s176, %s181
          %s183 = smul.addr %s23, 64
          %s184 = scalar_lea.hbm %s0, %s183
          %s186 = sshll.u32 %s179, 4
          %s187 = int_to_ptr.vmem [resolvable:$true] %s186
          %189 = dma.hbm_to_vmem [thread:$0]  %s184, 64, %s187, %s176
        $region28: #{tpu_custom_call.1} parent=23 // pred_fallthru
          _
      $region24: #{tpu_custom_call.1} parent=5 // pred_fallthru
        _
      %p190 = scmp.le.s32.totalorder 1, %s16
      %p191 = scmp.lt.s32.totalorder %s16, 3
      %p192 = pnand %p190, %p191
      %p193 = pneg %p192
      // Predicated region
      $region29: #{tpu_custom_call.1} parent=5 // pred_check
        _
      $region30: #{tpu_custom_call.1} parent=5 // pred_check_branch
        %195 = sbr.rel (%p192) target = $region32
      $region31: #{tpu_custom_call.1} parent=5 // pred_region
        %s196 = ssub.s32 %s16, 1
        %s197 = sand.u32 %s41, 1
        %s198 = scalar_lea.sflag [#allocation5], %s197
        %s199 = sand.u32 %s41, 1
        %s200 = smul.addr %s199, 4
        %s201 = scalar_lea.vmem [#allocation4], %s200
        // Predicated region
        $region33: #{tpu_custom_call.1} parent=31 // pred_check
          %p202 = pneg %p54
        $region34: #{tpu_custom_call.1} parent=31 // pred_check_branch
          %204 = sbr.rel (%p202) target = $region36
        $region35: #{tpu_custom_call.1} parent=31 // pred_region
          %205 = dma.done %s198, 64
        $region36: #{tpu_custom_call.1} parent=31 // pred_fallthru
          _
        // Predicated region
        $region37: #{tpu_custom_call.1} parent=31 // pred_check
          %p206 = pneg %p80
        $region38: #{tpu_custom_call.1} parent=31 // pred_check_branch
          %208 = sbr.rel (%p206) target = $region40
        $region39: #{tpu_custom_call.1} parent=31 // pred_region
          %209 = dma.done [#allocation8], 256
        $region40: #{tpu_custom_call.1} parent=31 // pred_fallthru
          _
        %s210 = sand.u32 %s41, 1
        %s211 = scalar_lea.sflag [#allocation5], %s210
        %s212 = sand.u32 %s41, 1
        %s213 = smul.addr %s212, 4
        %s214 = scalar_lea.vmem [#allocation4], %s213
        %p215 = pneg %p54
        %p216 = pneg %p51
        %p217 = pneg %p80
        %p218 = pneg %p77
        %p219 = scmp.lt.s32.totalorder %s26, 0
        %s220 = scalar_select %p219, %s26, 0
        %s221 = scalar_lea.vmem %s2, %s220
        %p222 = pneg %p106
        %p223 = pneg %p103
        %p224 = pneg %p132
        %p225 = pneg %p129
        %s226 = sand.u32 %s119, 1
        %s227 = scalar_lea.sflag [#allocation6], %s226
        %s228 = sand.u32 %s119, 1
        %s229 = smul.addr %s228, 8
        %s230 = scalar_lea.vmem [#allocation9], %s229
        %p231 = scmp.lt.s32.totalorder %s26, 0
        %s232 = scalar_select %p231, %s26, 0
        %s233 = scalar_lea.vmem %s2, %s232
        %p235 = scmp.eq.s32.totalorder %s26, 0
        // Predicated region
        $region41: #{tpu_custom_call.1} parent=31 // pred_check
          %p236 = pneg %p235
        $region42: #{tpu_custom_call.1} parent=31 // pred_check_branch
          %238 = sbr.rel (%p236) target = $region44
        $region43: #{tpu_custom_call.1} parent=31 // pred_region
          %vm239 = vcmask 7168
          %240 = vst.msk [vmem:[#allocation2] sm:$0xff] %vm239, -inf
          %241 = vst.msk [vmem:[#allocation3] sm:$0xff] %vm239, 0.0
        $region44: #{tpu_custom_call.1} parent=31 // pred_fallthru
          _
        %v242 = vld [vmem:[%s201] sm:$0xf]
        %v243 = vld [vmem:[#allocation7] sm:$0xf]
        %v244 = vld [vmem:[#allocation7 + $0x4] sm:$0xf]
        %v245 = vld [vmem:[#allocation7 + $0x8] sm:$0xf]
        %v246 = vld [vmem:[#allocation7 + $0xc] sm:$0xf]
        %v247 = vld [vmem:[%s233] sm:$0x1]
        %v249 = vlaneseq
        %v250 = vshrl.u32 %v249, 7
        %v251 = vsub.s32 0, %v250
        %v252 = vrot.slane %v247, %v251
        %v258 = vunpack.c.l.b16 %v243
        %v259 = vunpack.c.l.b16 %v244
        %v260 = vunpack.c.l.b16 %v245
        %v261 = vunpack.c.l.b16 %v246
        %v262 = vpack.c.b16 %v259, %v258
        %v263 = vpack.c.b16 %v261, %v260
        %vm266 = vcmask 261120
        %v268 = vsel %vm266, %v242, 0
        %270 = vmatprep.subr.bf16.mxu0 0
        %271 = vmatpush1.bf16.msra.mxu0 %v262
        %272 = vmatprep.subr.bf16.mxu0 0
        %273 = vmatpush1.bf16.msra.mxu0 %v263
        %274 = vmatprep.subr.bf16.mxu0 0
        %275 = vmatpush1.bf16.msra.mxu0 0
        %276 = vmatprep.subr.bf16.mxu0 0
        %277 = vmatpush1.bf16.msra.mxu0 0
        %278 = vmatprep.subr.bf16.mxu0 0
        %279 = vmatpush1.bf16.msra.mxu0 0
        %280 = vmatprep.subr.bf16.mxu0 0
        %281 = vmatpush1.bf16.msra.mxu0 0
        %282 = vmatprep.subr.bf16.mxu0 0
        %283 = vmatpush1.bf16.msra.mxu0 0
        %284 = vmatprep.subr.bf16.mxu0 0
        %285 = vmatpush1.bf16.msra.mxu0 0
        %286 = vmatprep.subr.bf16.mxu0 0
        %287 = vmatpush1.bf16.msra.mxu0 0
        %288 = vmatprep.subr.bf16.mxu0 0
        %289 = vmatpush1.bf16.msra.mxu0 0
        %290 = vmatprep.subr.bf16.mxu0 0
        %291 = vmatpush1.bf16.msra.mxu0 0
        %292 = vmatprep.subr.bf16.mxu0 0
        %293 = vmatpush1.bf16.msra.mxu0 0
        %294 = vmatprep.subr.bf16.mxu0 0
        %295 = vmatpush1.bf16.msra.mxu0 0
        %296 = vmatprep.subr.bf16.mxu0 0
        %297 = vmatpush1.bf16.msra.mxu0 0
        %298 = vmatprep.subr.bf16.mxu0 0
        %299 = vmatpush1.bf16.msra.mxu0 0
        %300 = vmatprep.subr.bf16.mxu0 0
        %301 = vmatpush1.bf16.msra.mxu0 0
        %302 = vmatprep.mubr.bf16.mxu0 0
        %303 = vmatmul.mubr.bf16.gmra.mrb[0].mxu0 %v268
        %v304 = vpop.f32.mrb[0].mxu0
        %v305 = vadd.f32 %v252, %v304
        %v306 = vpop.f32.mrb[0].mxu0
        %v307 = vpop.f32.mrb[0].mxu0
        %v308 = vpop.f32.mrb[0].mxu0
        %309 = vdwg.mxu0
        %v310 = vld [vmem:[#allocation2] sm:$0xff]
        %311 = vmax.xlane.f32.xlu0 %v305
        %v312 = vpop.xlane.xlu0 %311
        %v313 = vmax.f32 %v310, %v312
        %v314 = vld [vmem:[#allocation3] sm:$0xff]
        %v315 = vsub.f32 %v310, %v313
        %v316 = vmul.f32 %v315, 1.442695
        %v317 = vpow.pop %v316
        %v318 = vmul.f32 %v314, %v317
        %320 = vset.pattern.permute.xlu0 0
        %321 = vperm.xlu0 %320, %v313
        %v322 = vpop.permute.xlu0 %321
        %v324 = vsub.f32 %v305, %v322
        %v325 = vmul.f32 %v324, 1.442695
        %v326 = vpow.pop %v325
        %327 = vadd.xlane.f32.xlu0 %v326
        %v328 = vpop.xlane.xlu0 %327
        %v329 = vadd.f32 %v318, %v328
        %vm330 = vcmask 7168
        %331 = vst.msk [vmem:[#allocation3] sm:$0xff] %vm330, %v329
        %332 = vst.msk [vmem:[#allocation2] sm:$0xff] %vm330, %v313
        %s333 = smul.u32 %s26, 128
        %s334 = sshra.s32 %s333, 7
        %s335 = sand.u32 %s333, 127
        %s336 = scalar_lea.vmem %s230, %s334 [#allocation9]
        %337 = vst [vmem:[%s336] sm:$0xff] %v305
        // Predicated region
        $region45: #{tpu_custom_call.1} parent=31 // pred_check
          %p338 = pneg %p235
        $region46: #{tpu_custom_call.1} parent=31 // pred_check_branch
          %340 = sbr.rel (%p338) target = $region48
        $region47: #{tpu_custom_call.1} parent=31 // pred_region
          %v341 = vld [vmem:[#allocation2] sm:$0xff]
          %v342 = vld [vmem:[#allocation3] sm:$0xff]
          %v343 = vlog2.pop %v342
          %v344 = vmul.f32 %v343, 0.6931472
          %v345 = vadd.f32 %v341, %v344
          %v346 = vld [vmem:[%s230] sm:$0xff]
          %348 = vset.pattern.permute.xlu0 0
          %349 = vperm.xlu0 %348, %v345
          %v350 = vpop.permute.xlu0 %349
          %v352 = vsub.f32 %v346, %v350
          %353 = vst [vmem:[%s230] sm:$0xff] %v352
        $region48: #{tpu_custom_call.1} parent=31 // pred_fallthru
          _
        %s354 = sand.u32 %s119, 1
        %s355 = scalar_lea.sflag [#allocation6], %s354
        %s356 = sand.u32 %s119, 1
        %s357 = smul.addr %s356, 8
        %s358 = scalar_lea.vmem [#allocation9], %s357
        // Predicated region
        $region49: #{tpu_custom_call.1} parent=31 // pred_check
          %p359 = pneg %p129
        $region50: #{tpu_custom_call.1} parent=31 // pred_check_branch
          %361 = sbr.rel (%p359) target = $region52
        $region51: #{tpu_custom_call.1} parent=31 // pred_region
          %s363 = ssub.s32 128, 128
          %364 = vsyncadd %s355, %s363
          %s365 = smul.addr %s25, 128
          %s366 = scalar_lea.hbm %s3, %s365
          %s368 = sshll.u32 %s358, 4
          %s369 = int_to_ptr.vmem [resolvable:$true] %s368
          %371 = dma.vmem_to_hbm [thread:$0]  %s369, 128, %s366, %s355
        $region52: #{tpu_custom_call.1} parent=31 // pred_fallthru
          _
      $region32: #{tpu_custom_call.1} parent=5 // pred_fallthru
        _
      %p372 = scmp.le.s32.totalorder 2, %s16
      // Predicated region
      $region53: #{tpu_custom_call.1} parent=5 // pred_check
        %p373 = pneg %p372
      $region54: #{tpu_custom_call.1} parent=5 // pred_check_branch
        %375 = sbr.rel (%p373) target = $region56
      $region55: #{tpu_custom_call.1} parent=5 // pred_region
        %s376 = ssub.s32 %s16, 2
        // Predicated region
        $region57: #{tpu_custom_call.1} parent=55 // pred_check
          %p377 = pneg %p135
        $region58: #{tpu_custom_call.1} parent=55 // pred_check_branch
          %379 = sbr.rel (%p377) target = $region60
        $region59: #{tpu_custom_call.1} parent=55 // pred_region
          %s380 = sand.u32 %s120, 1
          %s381 = scalar_lea.sflag [#allocation6], %s380
          %s382 = sand.u32 %s120, 1
          %s383 = smul.addr %s382, 8
          %s384 = scalar_lea.vmem [#allocation9], %s383
          %385 = dma.done %s381, 128
        $region60: #{tpu_custom_call.1} parent=55 // pred_fallthru
          _
      $region56: #{tpu_custom_call.1} parent=5 // pred_fallthru
        _
    $region6: #{tpu_custom_call.1} parent=1 // loop_footer
      %s20 = sadd.s32 1, %s16
    $region7: #{tpu_custom_call.1} parent=1 // loop_footer_branch
      %15 = sbr.rel target = $region3
    $region8: #{tpu_custom_call.1} parent=1 // loop_exit
      _
    %386 = vsyncpa [#allocation5], 1
    %s387 = scalar_lea.sflag [#allocation5], 1
    %388 = vsyncpa %s387, 1
    %389 = vsyncpa [#allocation8], 1
    %390 = vsyncpa [#allocation6], 1
    %s391 = scalar_lea.sflag [#allocation6], 1
    %392 = vsyncpa %s391, 1

</llo_original>
